<compile_context>
chip_gen: v5e
topology: v5e:2x2
jax: 0.10.0
libtpu: 0.0.40
codegen_flags: <defaults>
</compile_context>

<pallas_src>
from functools import partial

import jax
import jax.numpy as jnp
from jax.experimental import pallas as pl
from jax.experimental.pallas import tpu as pltpu

# ---------------------------------------------------------------------------
# Model dimensions (from the PyTorch spec)
# ---------------------------------------------------------------------------
HIDDEN = 32            # NN(hidden_dim=32)
NUM_LAYERS = 2         # NN(num_layers=2)
STATE_DIM = 4          # CartPole observation dim (LazyLinear infers this)
OUTPUT_DIM = 2         # CartPole action space
LEAKY_SLOPE = 0.01     # torch.nn.functional.leaky_relu default
LN_EPS = 1e-5          # torch.nn.functional.layer_norm default

# Fused (actor ++ critic) dimensions
FFN = 2 * HIDDEN       # per-branch FFN dim           = 64
FUSED_H = 2 * HIDDEN   # fused trunk hidden dim       = 64
FUSED_F = 2 * FFN      # fused FFN dim                = 128 (full vreg width)
IN_PAD = 8             # state features padded 4 -> 8 (sublane aligned);
                       # lane STATE_DIM carries a constant 1.0 (bias fold)
OUT_PAD = 128          # lane-dense output slab: [logit0, logit1, value, 0...]

_N_TRUNK = 2 + 4 * NUM_LAYERS   # params per (unfused) trunk

# ---------------------------------------------------------------------------
# Parameter-slab layout (all row offsets are multiples of 8)
# ---------------------------------------------------------------------------
# Slab A: lane width = FUSED_H (64)
A_W_IN = 0                                  # (8, 64) fused input weight; row
                                            #   STATE_DIM holds the fused bias
A_G = IN_PAD                                # (64, 64) block-diag grouped-mean
A_LAYER0 = A_G + FUSED_H                    # = 72
A_LAYER_STRIDE = FUSED_F + 8                # = 136


def A_W_LO(layer):                          # (128, 64) fused, PRE-CENTERED down-proj
    return A_LAYER0 + layer * A_LAYER_STRIDE


def A_B_LO(layer):                          # row: fused, pre-centered down bias
    return A_W_LO(layer) + FUSED_F


A_ROWS = A_LAYER0 + NUM_LAYERS * A_LAYER_STRIDE     # 344

# Slab B: lane width = FUSED_F (128)
B_LAYER_STRIDE = FUSED_H + 8                # = 72


def B_W_UP(layer):                          # (64, 128) fused up-projection
    return layer * B_LAYER_STRIDE


def B_B_UP(layer):                          # row: fused up-proj bias (1, 128)
    return B_W_UP(layer) + FUSED_H


B_HEAD_W = NUM_LAYERS * B_LAYER_STRIDE      # (64, 128) fused actor+critic head
B_HEAD_B = B_HEAD_W + FUSED_H               # row: fused head bias (1, 128)
B_ROWS = B_HEAD_B + 8                       # 216


# ---------------------------------------------------------------------------
# Pallas kernel: full ActorCritic.forward (fused actor + critic)
# ---------------------------------------------------------------------------
def actor_critic_kernel(x_ref, a_ref, b_ref, out_ref):
    x = x_ref[...]                                            # (bb, IN_PAD)

    # Parameter views (static slices at 8-aligned offsets; hoisted).
    w_in = a_ref[A_W_IN:A_W_IN + IN_PAD, :]                   # (8, 64) incl. bias row
    g = a_ref[A_G:A_G + FUSED_H, :]                           # (64, 64)

    # Fused input layer (bias folded via the ones lane of x):
    # h lanes [0:32]=actor trunk, [32:64]=critic trunk.
    h = jnp.dot(x, w_in, preferred_element_type=jnp.float32)

    for l in range(NUM_LAYERS):                               # static unroll (2)
        w_up = b_ref[B_W_UP(l):B_W_UP(l) + FUSED_H, :]        # (64, 128)
        b_up = b_ref[B_B_UP(l):B_B_UP(l) + 1, :]              # (1, 128)
        w_lo = a_ref[A_W_LO(l):A_W_LO(l) + FUSED_F, :]        # (128, 64) pre-centered
        b_lo = a_ref[A_B_LO(l):A_B_LO(l) + 1, :]              # (1, 64)  pre-centered

        s = jnp.dot(h, w_up, preferred_element_type=jnp.float32) + b_up
        s = jnp.where(s > 0, s, LEAKY_SLOPE * s)              # leaky_relu

        # Down-proj with the centering projection folded into the weights:
        # c == y - mean_branch(y) exactly (mean matmul eliminated).
        c = jnp.dot(s, w_lo, preferred_element_type=jnp.float32) + b_lo

        # Per-branch biased variance via the block-diagonal grouped-mean
        # matrix `g` (reduction on the MXU, not the XLU).
        v = jnp.dot(c * c, g, preferred_element_type=jnp.float32)
        h = h + c * jax.lax.rsqrt(v + LN_EPS)

    head_w = b_ref[B_HEAD_W:B_HEAD_W + FUSED_H, :]            # (64, 128)
    head_b = b_ref[B_HEAD_B:B_HEAD_B + 1, :]                  # (1, 128)
    # Lane-dense output slab: cols 0..1 = logits, col 2 = value, rest zero.
    out_ref[...] = jnp.dot(h, head_w, preferred_element_type=jnp.float32) + head_b


# ---------------------------------------------------------------------------
# Wrapper: batch-gridded pallas_call
# ---------------------------------------------------------------------------
def _round_up(n, m):
    return ((n + m - 1) // m) * m


def _cdiv(a, b):
    return (a + b - 1) // b


@partial(jax.jit, static_argnames=("block_b",))
def actor_critic_forward(x, slab_a, slab_b, block_b=256):
    B, D = x.shape
    # Pick a batch tile that minimizes padded rows (all static at trace time).
    B8 = _round_up(B, 8)
    n_blocks = _cdiv(B8, block_b)
    bb = _round_up(_cdiv(B8, n_blocks), 8)
    B_pad = n_blocks * bb

    x_pad = jnp.zeros((B_pad, IN_PAD), jnp.float32)
    x_pad = x_pad.at[:, STATE_DIM].set(1.0)            # ones lane -> input bias
    x_pad = x_pad.at[:B, :D].set(x.astype(jnp.float32))

    out = pl.pallas_call(
        actor_critic_kernel,
        out_shape=jax.ShapeDtypeStruct((B_pad, OUT_PAD), jnp.float32),
        grid=(n_blocks,),
        in_specs=[
            pl.BlockSpec((bb, IN_PAD), lambda i: (i, 0)),       # batch tile
            pl.BlockSpec((A_ROWS, FUSED_H), lambda i: (0, 0)),  # params (resident)
            pl.BlockSpec((B_ROWS, FUSED_F), lambda i: (0, 0)),  # params (resident)
        ],
        out_specs=pl.BlockSpec((bb, OUT_PAD), lambda i: (i, 0)),
        compiler_params=pltpu.CompilerParams(
            dimension_semantics=("parallel",),   # shard batch over TCs (v7x)
        ),
    )(x_pad, slab_a, slab_b)

    logits = out[:B, :OUTPUT_DIM]
    value = out[:B, OUTPUT_DIM]                 # torch: .squeeze() -> (B,)
    return logits, value


# ---------------------------------------------------------------------------
# Parameter construction (PyTorch-Linear-style uniform init) + slab packing
# ---------------------------------------------------------------------------
def init_linear(key, fan_in, fan_out):
    kw, kb = jax.random.split(key)
    bound = 1.0 / (fan_in ** 0.5)
    w = jax.random.uniform(kw, (fan_in, fan_out), jnp.float32, -bound, bound)
    b = jax.random.uniform(kb, (fan_out,), jnp.float32, -bound, bound)
    return w, b


def init_trunk(key, in_dim, hidden=HIDDEN, num_layers=NUM_LAYERS):
    params = []
    keys = jax.random.split(key, 1 + 2 * num_layers)
    w, b = init_linear(keys[0], in_dim, hidden)
    params += [w, b]
    for l in range(num_layers):
        w1, b1 = init_linear(keys[1 + 2 * l], hidden, hidden * 2)
        w2, b2 = init_linear(keys[2 + 2 * l], hidden * 2, hidden)
        params += [w1, b1, w2, b2]
    return params


def init_actor_critic_params(key, in_dim=STATE_DIM, output_dim=OUTPUT_DIM):
    k_actor, k_ahead, k_critic, k_vhead = jax.random.split(key, 4)
    params = []
    params += init_trunk(k_actor, in_dim)                      # outputNN
    params += list(init_linear(k_ahead, HIDDEN, output_dim))   # outputHead
    params += init_trunk(k_critic, in_dim)                     # valueNN
    params += list(init_linear(k_vhead, HIDDEN, 1))            # valueHead
    return params


def pack_params(params):
    """Pack per-branch params into the two fused, pre-padded slabs."""
    actor = params[:_N_TRUNK]
    ahw, ahb = params[_N_TRUNK], params[_N_TRUNK + 1]
    critic = params[_N_TRUNK + 2: 2 * _N_TRUNK + 2]
    chw, chb = params[2 * _N_TRUNK + 2], params[2 * _N_TRUNK + 3]

    slab_a = jnp.zeros((A_ROWS, FUSED_H), jnp.float32)
    slab_b = jnp.zeros((B_ROWS, FUSED_F), jnp.float32)

    # Fused input layer (shared input -> column concat); bias in row STATE_DIM.
    slab_a = slab_a.at[0:STATE_DIM, 0:HIDDEN].set(actor[0])
    slab_a = slab_a.at[0:STATE_DIM, HIDDEN:FUSED_H].set(critic[0])
    slab_a = slab_a.at[STATE_DIM, 0:HIDDEN].set(actor[1])
    slab_a = slab_a.at[STATE_DIM, HIDDEN:FUSED_H].set(critic[1])

    # Block-diagonal grouped-mean matrix (per-branch variance on the MXU).
    rr = jnp.arange(FUSED_H)[:, None] // HIDDEN
    cc = jnp.arange(FUSED_H)[None, :] // HIDDEN
    g = jnp.where(rr == cc, 1.0 / HIDDEN, 0.0).astype(jnp.float32)
    slab_a = slab_a.at[A_G:A_G + FUSED_H, :].set(g)

    # Centering projection folded into the down-projection (exact: mean is
    # linear), eliminating the layer_norm mean matmul in the kernel.
    cproj = (jnp.eye(HIDDEN, dtype=jnp.float32)
             - jnp.full((HIDDEN, HIDDEN), 1.0 / HIDDEN, jnp.float32))

    for l in range(NUM_LAYERS):
        awu, abu, awl, abl = actor[2 + 4 * l: 6 + 4 * l]
        cwu, cbu, cwl, cbl = critic[2 + 4 * l: 6 + 4 * l]

        ru = B_W_UP(l)                                   # up-proj, block-diag
        slab_b = slab_b.at[ru:ru + HIDDEN, 0:FFN].set(awu)
        slab_b = slab_b.at[ru + HIDDEN:ru + FUSED_H, FFN:FUSED_F].set(cwu)
        slab_b = slab_b.at[B_B_UP(l), 0:FFN].set(abu)
        slab_b = slab_b.at[B_B_UP(l), FFN:FUSED_F].set(cbu)

        rl = A_W_LO(l)                                   # pre-centered down-proj
        slab_a = slab_a.at[rl:rl + FFN, 0:HIDDEN].set(awl @ cproj)
        slab_a = slab_a.at[rl + FFN:rl + FUSED_F, HIDDEN:FUSED_H].set(cwl @ cproj)
        slab_a = slab_a.at[A_B_LO(l), 0:HIDDEN].set(abl @ cproj)
        slab_a = slab_a.at[A_B_LO(l), HIDDEN:FUSED_H].set(cbl @ cproj)

    # Fused head: cols 0..1 actor logits, col 2 critic value, rest zero pad.
    slab_b = slab_b.at[B_HEAD_W:B_HEAD_W + HIDDEN, 0:OUTPUT_DIM].set(ahw)
    slab_b = slab_b.at[B_HEAD_W + HIDDEN:B_HEAD_W + FUSED_H,
                       OUTPUT_DIM:OUTPUT_DIM + 1].set(chw)
    slab_b = slab_b.at[B_HEAD_B, 0:OUTPUT_DIM].set(ahb)
    slab_b = slab_b.at[B_HEAD_B, OUTPUT_DIM].set(chb[0])
    return slab_a, slab_b


# ---------------------------------------------------------------------------
# Pure-JAX reference (uses the UNFUSED params) for a correctness sanity check
# ---------------------------------------------------------------------------
def _ref_trunk(x, params):
    h = x @ params[0] + params[1]
    for l in range(NUM_LAYERS):
        w1, b1, w2, b2 = params[2 + 4 * l: 6 + 4 * l]
        u = h @ w1 + b1
        u = jnp.where(u > 0, u, LEAKY_SLOPE * u)
        y = u @ w2 + b2
        m = jnp.mean(y, axis=-1, keepdims=True)
        v = jnp.mean((y - m) ** 2, axis=-1, keepdims=True)
        h = h + (y - m) / jnp.sqrt(v + LN_EPS)
    return h


def _ref_forward(x, params):
    a = _ref_trunk(x, params[:_N_TRUNK])
    logits = a @ params[_N_TRUNK] + params[_N_TRUNK + 1]
    c = _ref_trunk(x, params[_N_TRUNK + 2: 2 * _N_TRUNK + 2])
    value = (c @ params[2 * _N_TRUNK + 2] + params[2 * _N_TRUNK + 3])[:, 0]
    return logits, value


# TODO(synk): training-side pieces of ActorCritic (AdamW step, GAE, Categorical
# sampling / log-prob / entropy losses) are not part of forward() and are not
# implemented as Pallas kernels.

if __name__ == "__main__":
    key = jax.random.PRNGKey(0)
    k_params, k_x, k_x2 = jax.random.split(key, 3)

    params = init_actor_critic_params(k_params)
    slab_a, slab_b = pack_params(params)

    # Small batch (single grid step).
    B = 8
    x = jax.random.normal(k_x, (B, STATE_DIM), dtype=jnp.float32)
    logits, value = actor_critic_forward(x, slab_a, slab_b)
    jax.block_until_ready((logits, value))

    ref_logits, ref_value = _ref_forward(x, params)
    assert logits.shape == (B, OUTPUT_DIM) and value.shape == (B,)
    assert jnp.allclose(logits, ref_logits, atol=1e-3, rtol=1e-3)
    assert jnp.allclose(value, ref_value, atol=1e-3, rtol=1e-3)

    # Larger, non-multiple batch exercising the gridded batch axis + padding.
    B2 = 300
    x2 = jax.random.normal(k_x2, (B2, STATE_DIM), dtype=jnp.float32)
    logits2, value2 = actor_critic_forward(x2, slab_a, slab_b)
    jax.block_until_ready((logits2, value2))
    ref_logits2, ref_value2 = _ref_forward(x2, params)
    assert logits2.shape == (B2, OUTPUT_DIM) and value2.shape == (B2,)
    assert jnp.allclose(logits2, ref_logits2, atol=1e-3, rtol=1e-3)
    assert jnp.allclose(value2, ref_value2, atol=1e-3, rtol=1e-3)

    print("KERNEL_OK")
</pallas_src>

<mosaic_0001>
module attributes {stable_mosaic.version = 11 : i64} {
  func.func @actor_critic_kernel(%arg0: i32, %arg1: memref<8x8xf32, #tpu.memory_space<vmem>>, %arg2: memref<344x64xf32, #tpu.memory_space<vmem>>, %arg3: memref<216x128xf32, #tpu.memory_space<vmem>>, %arg4: memref<8x128xf32, #tpu.memory_space<vmem>>) attributes {dimension_semantics = [#tpu.dimension_semantics<parallel>], iteration_bounds = array<i64: 1>, scalar_prefetch = 0 : i64, scratch_operands = 0 : i64, tpu.core_type = #tpu.core_type<tc>, window_params = [{transform_indices = @transform_0, window_bounds = array<i64: 8, 8>}, {pipeline_mode = #tpu.pipeline_mode<synchronous>, transform_indices = @transform_1, window_bounds = array<i64: 344, 64>}, {pipeline_mode = #tpu.pipeline_mode<synchronous>, transform_indices = @transform_2, window_bounds = array<i64: 216, 128>}, {transform_indices = @transform_3, window_bounds = array<i64: 8, 128>}]} {
    %c0 = arith.constant 0 : index
    %c0_0 = arith.constant 0 : index
    %0 = vector.load %arg1[%c0, %c0_0] : memref<8x8xf32, #tpu.memory_space<vmem>>, vector<8x8xf32>
    %c0_1 = arith.constant 0 : index
    %c0_2 = arith.constant 0 : index
    %1 = vector.load %arg2[%c0_1, %c0_2] : memref<344x64xf32, #tpu.memory_space<vmem>>, vector<8x64xf32>
    %c8 = arith.constant 8 : index
    %c0_3 = arith.constant 0 : index
    %2 = vector.load %arg2[%c8, %c0_3] : memref<344x64xf32, #tpu.memory_space<vmem>>, vector<64x64xf32>
    %cst = arith.constant dense<0.000000e+00> : vector<8x64xf32>
    %3 = tpu.matmul %0, %1, %cst {dimension_numbers = #tpu.dot_dimension_numbers<[1], [0], [0], [1], [0, 0, 1, 1], [], []>} : vector<8x8xf32>, vector<8x64xf32>, vector<8x64xf32> -> vector<8x64xf32>
    %c0_4 = arith.constant 0 : index
    %c0_5 = arith.constant 0 : index
    %4 = vector.load %arg3[%c0_4, %c0_5] : memref<216x128xf32, #tpu.memory_space<vmem>>, vector<64x128xf32>
    %c64 = arith.constant 64 : index
    %c0_6 = arith.constant 0 : index
    %5 = vector.load %arg3[%c64, %c0_6] : memref<216x128xf32, #tpu.memory_space<vmem>>, vector<1x128xf32>
    %c72 = arith.constant 72 : index
    %c0_7 = arith.constant 0 : index
    %6 = vector.load %arg2[%c72, %c0_7] : memref<344x64xf32, #tpu.memory_space<vmem>>, vector<128x64xf32>
    %c200 = arith.constant 200 : index
    %c0_8 = arith.constant 0 : index
    %7 = vector.load %arg2[%c200, %c0_8] : memref<344x64xf32, #tpu.memory_space<vmem>>, vector<1x64xf32>
    %cst_9 = arith.constant dense<0.000000e+00> : vector<8x128xf32>
    %8 = tpu.matmul %3, %4, %cst_9 {dimension_numbers = #tpu.dot_dimension_numbers<[1], [0], [0], [1], [0, 0, 1, 1], [], []>} : vector<8x64xf32>, vector<64x128xf32>, vector<8x128xf32> -> vector<8x128xf32>
    %9 = vector.broadcast %5 : vector<1x128xf32> to vector<8x128xf32>
    %10 = arith.addf %8, %9 : vector<8x128xf32>
    %cst_10 = arith.constant 0.000000e+00 : f32
    %11 = vector.broadcast %cst_10 : f32 to vector<8x128xf32>
    %12 = arith.cmpf ogt, %10, %11 : vector<8x128xf32>
    %cst_11 = arith.constant 0.00999999977 : f32
    %13 = vector.broadcast %cst_11 : f32 to vector<8x128xf32>
    %14 = arith.mulf %13, %10 : vector<8x128xf32>
    %15 = arith.select %12, %10, %14 : vector<8x128xi1>, vector<8x128xf32>
    %cst_12 = arith.constant dense<0.000000e+00> : vector<8x64xf32>
    %16 = tpu.matmul %15, %6, %cst_12 {dimension_numbers = #tpu.dot_dimension_numbers<[1], [0], [0], [1], [0, 0, 1, 1], [], []>} : vector<8x128xf32>, vector<128x64xf32>, vector<8x64xf32> -> vector<8x64xf32>
    %17 = vector.broadcast %7 : vector<1x64xf32> to vector<8x64xf32>
    %18 = arith.addf %16, %17 : vector<8x64xf32>
    %19 = arith.mulf %18, %18 : vector<8x64xf32>
    %cst_13 = arith.constant dense<0.000000e+00> : vector<8x64xf32>
    %20 = tpu.matmul %19, %2, %cst_13 {dimension_numbers = #tpu.dot_dimension_numbers<[1], [0], [0], [1], [0, 0, 1, 1], [], []>} : vector<8x64xf32>, vector<64x64xf32>, vector<8x64xf32> -> vector<8x64xf32>
    %cst_14 = arith.constant 9.99999974E-6 : f32
    %21 = vector.broadcast %cst_14 : f32 to vector<8x64xf32>
    %22 = arith.addf %20, %21 : vector<8x64xf32>
    %23 = math.rsqrt %22 : vector<8x64xf32>
    %24 = arith.mulf %18, %23 : vector<8x64xf32>
    %25 = arith.addf %3, %24 : vector<8x64xf32>
    %c72_15 = arith.constant 72 : index
    %c0_16 = arith.constant 0 : index
    %26 = vector.load %arg3[%c72_15, %c0_16] : memref<216x128xf32, #tpu.memory_space<vmem>>, vector<64x128xf32>
    %c136 = arith.constant 136 : index
    %c0_17 = arith.constant 0 : index
    %27 = vector.load %arg3[%c136, %c0_17] : memref<216x128xf32, #tpu.memory_space<vmem>>, vector<1x128xf32>
    %c208 = arith.constant 208 : index
    %c0_18 = arith.constant 0 : index
    %28 = vector.load %arg2[%c208, %c0_18] : memref<344x64xf32, #tpu.memory_space<vmem>>, vector<128x64xf32>
    %c336 = arith.constant 336 : index
    %c0_19 = arith.constant 0 : index
    %29 = vector.load %arg2[%c336, %c0_19] : memref<344x64xf32, #tpu.memory_space<vmem>>, vector<1x64xf32>
    %cst_20 = arith.constant dense<0.000000e+00> : vector<8x128xf32>
    %30 = tpu.matmul %25, %26, %cst_20 {dimension_numbers = #tpu.dot_dimension_numbers<[1], [0], [0], [1], [0, 0, 1, 1], [], []>} : vector<8x64xf32>, vector<64x128xf32>, vector<8x128xf32> -> vector<8x128xf32>
    %31 = vector.broadcast %27 : vector<1x128xf32> to vector<8x128xf32>
    %32 = arith.addf %30, %31 : vector<8x128xf32>
    %cst_21 = arith.constant 0.000000e+00 : f32
    %33 = vector.broadcast %cst_21 : f32 to vector<8x128xf32>
    %34 = arith.cmpf ogt, %32, %33 : vector<8x128xf32>
    %cst_22 = arith.constant 0.00999999977 : f32
    %35 = vector.broadcast %cst_22 : f32 to vector<8x128xf32>
    %36 = arith.mulf %35, %32 : vector<8x128xf32>
    %37 = arith.select %34, %32, %36 : vector<8x128xi1>, vector<8x128xf32>
    %cst_23 = arith.constant dense<0.000000e+00> : vector<8x64xf32>
    %38 = tpu.matmul %37, %28, %cst_23 {dimension_numbers = #tpu.dot_dimension_numbers<[1], [0], [0], [1], [0, 0, 1, 1], [], []>} : vector<8x128xf32>, vector<128x64xf32>, vector<8x64xf32> -> vector<8x64xf32>
    %39 = vector.broadcast %29 : vector<1x64xf32> to vector<8x64xf32>
    %40 = arith.addf %38, %39 : vector<8x64xf32>
    %41 = arith.mulf %40, %40 : vector<8x64xf32>
    %cst_24 = arith.constant dense<0.000000e+00> : vector<8x64xf32>
    %42 = tpu.matmul %41, %2, %cst_24 {dimension_numbers = #tpu.dot_dimension_numbers<[1], [0], [0], [1], [0, 0, 1, 1], [], []>} : vector<8x64xf32>, vector<64x64xf32>, vector<8x64xf32> -> vector<8x64xf32>
    %cst_25 = arith.constant 9.99999974E-6 : f32
    %43 = vector.broadcast %cst_25 : f32 to vector<8x64xf32>
    %44 = arith.addf %42, %43 : vector<8x64xf32>
    %45 = math.rsqrt %44 : vector<8x64xf32>
    %46 = arith.mulf %40, %45 : vector<8x64xf32>
    %47 = arith.addf %25, %46 : vector<8x64xf32>
    %c144 = arith.constant 144 : index
    %c0_26 = arith.constant 0 : index
    %48 = vector.load %arg3[%c144, %c0_26] : memref<216x128xf32, #tpu.memory_space<vmem>>, vector<64x128xf32>
    %c208_27 = arith.constant 208 : index
    %c0_28 = arith.constant 0 : index
    %49 = vector.load %arg3[%c208_27, %c0_28] : memref<216x128xf32, #tpu.memory_space<vmem>>, vector<1x128xf32>
    %cst_29 = arith.constant dense<0.000000e+00> : vector<8x128xf32>
    %50 = tpu.matmul %47, %48, %cst_29 {dimension_numbers = #tpu.dot_dimension_numbers<[1], [0], [0], [1], [0, 0, 1, 1], [], []>} : vector<8x64xf32>, vector<64x128xf32>, vector<8x128xf32> -> vector<8x128xf32>
    %51 = vector.broadcast %49 : vector<1x128xf32> to vector<8x128xf32>
    %52 = arith.addf %50, %51 : vector<8x128xf32>
    %c0_30 = arith.constant 0 : index
    %c0_31 = arith.constant 0 : index
    %53 = vector.load %arg4[%c0_30, %c0_31] : memref<8x128xf32, #tpu.memory_space<vmem>>, vector<8x128xf32>
    tpu.vector_store %arg4[%c0_30, %c0_31], %52 {strides = array<i32>} : memref<8x128xf32, #tpu.memory_space<vmem>>, vector<8x128xf32>,
    return
  }
  func.func @transform_0(%arg0: i32) -> (i32, i32) {
    %c0_i32 = arith.constant 0 : i32
    %c0_i32_0 = arith.constant 0 : i32
    return %arg0, %c0_i32 : i32, i32
  }
  func.func @transform_1(%arg0: i32) -> (i32, i32) {
    %c0_i32 = arith.constant 0 : i32
    %c0_i32_0 = arith.constant 0 : i32
    %c0_i32_1 = arith.constant 0 : i32
    return %c0_i32, %c0_i32_0 : i32, i32
  }
  func.func @transform_2(%arg0: i32) -> (i32, i32) {
    %c0_i32 = arith.constant 0 : i32
    %c0_i32_0 = arith.constant 0 : i32
    %c0_i32_1 = arith.constant 0 : i32
    return %c0_i32, %c0_i32_0 : i32, i32
  }
  func.func @transform_3(%arg0: i32) -> (i32, i32) {
    %c0_i32 = arith.constant 0 : i32
    %c0_i32_0 = arith.constant 0 : i32
    return %arg0, %c0_i32 : i32, i32
  }
}

</mosaic_0001>

<llo_original>
// kernel: actor_critic_forward.1
$region0: #{actor_critic_forward.1}
  #allocation0 [shape = 'u32[]', space=smem, size = 0x4, offset = 0x4, fixed_abs, tag = 'smem constant byte address 0x4 - core index']
  #allocation1 [shape = 'u32[72,128]{1,0:T(1,128)}', space=vmem, size = 0x9000, scoped, tag = 'internal scratch']
  %s0 = inlined_call_operand.vmem [shape: f32[8,8], index: 0, kind: input, shape index: {}]
  %s1 = inlined_call_operand.vmem [shape: f32[344,64], index: 1, kind: input, shape index: {}]
  %s2 = inlined_call_operand.vmem [shape: f32[216,128], index: 2, kind: input, shape index: {}]
  %s3 = inlined_call_operand.vmem [shape: f32[8,128], index: 3, kind: output, shape index: {}]
  %s4 = sld [smem:[#allocation0]]
  $region22: #{actor_critic_forward.1} parent=0
    _
  %s6 = ssub.s32 1, %s4
  %s7 = scalar_select 0, %s6, %s4
  // Predicated region
  $region2: #{actor_critic_forward.1} parent=0 // pred_check
    _
  $region3: #{actor_critic_forward.1} parent=0 // pred_check_branch
    %9 = sbr.rel (0) target = $region5
  $region4: #{actor_critic_forward.1} parent=0 // pred_region
    _
  $region5: #{actor_critic_forward.1} parent=0 // pred_fallthru
    _
  // Predicated region
  $region6: #{actor_critic_forward.1} parent=0 // pred_check
    _
  $region7: #{actor_critic_forward.1} parent=0 // pred_check_branch
    %11 = sbr.rel (0) target = $region9
  $region8: #{actor_critic_forward.1} parent=0 // pred_region
    _
  $region9: #{actor_critic_forward.1} parent=0 // pred_fallthru
    _
  // Predicated region
  $region10: #{actor_critic_forward.1} parent=0 // pred_check
    _
  $region11: #{actor_critic_forward.1} parent=0 // pred_check_branch
    %13 = sbr.rel (0) target = $region13
  $region12: #{actor_critic_forward.1} parent=0 // pred_region
    _
  $region13: #{actor_critic_forward.1} parent=0 // pred_fallthru
    _
  %v14 = vld [vmem:[%s0] sm:$0xff]
  %v15 = vld [vmem:[%s1] sm:$0xff]
  %v16 = vld [vmem:[%s1 + $0x8] sm:$0xff]
  %v17 = vld [vmem:[%s1 + $0x10] sm:$0xff]
  %v18 = vld [vmem:[%s1 + $0x18] sm:$0xff]
  %v19 = vld [vmem:[%s1 + $0x20] sm:$0xff]
  %v20 = vld [vmem:[%s1 + $0x28] sm:$0xff]
  %v21 = vld [vmem:[%s1 + $0x30] sm:$0xff]
  %v22 = vld [vmem:[%s1 + $0x38] sm:$0xff]
  %v23 = vld [vmem:[%s1 + $0x40] sm:$0xff]
  %vm24 = vcmask 64512
  %v26 = vsel %vm24, %v14, 0
  %28 = vmatpush.msra.mxu0 0.0
  %29 = vmatpush.msra.mxu0 0.0
  %30 = vmatpush.msra.mxu0 0.0
  %31 = vmatpush.msra.mxu0 0.0
  %32 = vmatpush.msra.mxu0 0.0
  %33 = vmatpush.msra.mxu0 0.0
  %34 = vmatpush.msra.mxu0 0.0
  %35 = vmatpush.msra.mxu0 0.0
  %36 = vmatpush.msra.mxu0 0.0
  %37 = vmatpush.msra.mxu0 0.0
  %38 = vmatpush.msra.mxu0 0.0
  %39 = vmatpush.msra.mxu0 0.0
  %40 = vmatpush.msra.mxu0 0.0
  %41 = vmatpush.msra.mxu0 0.0
  %42 = vmatpush.msra.mxu0 0.0
  %43 = vmatpush.msra.mxu0 %v15
  %44 = vmatmul.f32.gmra.mxu0 %v26
  %v45 = vpop.f32.mrf.mxu0
  %v46 = vadd.f32 0.0, %v45
  %47 = vdwg.mxu0
  %v48 = vld [vmem:[%s2] sm:$0xff]
  %v49 = vld [vmem:[%s2 + $0x8] sm:$0xff]
  %v50 = vld [vmem:[%s2 + $0x10] sm:$0xff]
  %v51 = vld [vmem:[%s2 + $0x18] sm:$0xff]
  %v52 = vld [vmem:[%s2 + $0x20] sm:$0xff]
  %v53 = vld [vmem:[%s2 + $0x28] sm:$0xff]
  %v54 = vld [vmem:[%s2 + $0x30] sm:$0xff]
  %v55 = vld [vmem:[%s2 + $0x38] sm:$0xff]
  %v56 = vld [vmem:[%s2 + $0x40] sm:$0x1]
  %v57 = vld [vmem:[%s1 + $0x48] sm:$0xff]
  %v58 = vld [vmem:[%s1 + $0x50] sm:$0xff]
  %v59 = vld [vmem:[%s1 + $0x58] sm:$0xff]
  %v60 = vld [vmem:[%s1 + $0x60] sm:$0xff]
  %v61 = vld [vmem:[%s1 + $0x68] sm:$0xff]
  %v62 = vld [vmem:[%s1 + $0x70] sm:$0xff]
  %v63 = vld [vmem:[%s1 + $0x78] sm:$0xff]
  %v64 = vld [vmem:[%s1 + $0x80] sm:$0xff]
  %v65 = vld [vmem:[%s1 + $0x88] sm:$0xff]
  %v66 = vld [vmem:[%s1 + $0x90] sm:$0xff]
  %v67 = vld [vmem:[%s1 + $0x98] sm:$0xff]
  %v68 = vld [vmem:[%s1 + $0xa0] sm:$0xff]
  %v69 = vld [vmem:[%s1 + $0xa8] sm:$0xff]
  %v70 = vld [vmem:[%s1 + $0xb0] sm:$0xff]
  %v71 = vld [vmem:[%s1 + $0xb8] sm:$0xff]
  %v72 = vld [vmem:[%s1 + $0xc0] sm:$0xff]
  %v73 = vld [vmem:[%s1 + $0xc8] sm:$0x1]
  %v74 = vperm.slane %v56, 0
  %vm75 = vcmask 523264
  %v77 = vsel %vm75, %v46, 0
  %79 = vmatpush.msra.mxu0 0.0
  %80 = vmatpush.msra.mxu0 0.0
  %81 = vmatpush.msra.mxu0 0.0
  %82 = vmatpush.msra.mxu0 0.0
  %83 = vmatpush.msra.mxu0 0.0
  %84 = vmatpush.msra.mxu0 0.0
  %85 = vmatpush.msra.mxu0 0.0
  %86 = vmatpush.msra.mxu0 0.0
  %87 = vmatpush.msra.mxu0 %v55
  %88 = vmatpush.msra.mxu0 %v54
  %89 = vmatpush.msra.mxu0 %v53
  %90 = vmatpush.msra.mxu0 %v52
  %91 = vmatpush.msra.mxu0 %v51
  %92 = vmatpush.msra.mxu0 %v50
  %93 = vmatpush.msra.mxu0 %v49
  %94 = vmatpush.msra.mxu0 %v48
  %95 = vmatmul.f32.gmra.mxu0 %v77
  %v96 = vpop.f32.mrf.mxu0
  %v97 = vadd.f32 %v74, %v96
  %98 = vdwg.mxu0
  %vm99 = vcmp.gt.f32.partialorder %v97, 0.0
  %v100 = vmul.f32 %v97, 0.01
  %v101 = vsel %vm99, %v97, %v100
  %v102 = vperm.slane %v73, 0
  %103 = vmatpush.msra.mxu0 %v72
  %104 = vmatpush.msra.mxu0 %v71
  %105 = vmatpush.msra.mxu0 %v70
  %106 = vmatpush.msra.mxu0 %v69
  %107 = vmatpush.msra.mxu0 %v68
  %108 = vmatpush.msra.mxu0 %v67
  %109 = vmatpush.msra.mxu0 %v66
  %110 = vmatpush.msra.mxu0 %v65
  %111 = vmatpush.msra.mxu0 %v64
  %112 = vmatpush.msra.mxu0 %v63
  %113 = vmatpush.msra.mxu0 %v62
  %114 = vmatpush.msra.mxu0 %v61
  %115 = vmatpush.msra.mxu0 %v60
  %116 = vmatpush.msra.mxu0 %v59
  %117 = vmatpush.msra.mxu0 %v58
  %118 = vmatpush.msra.mxu0 %v57
  %119 = vmatmul.f32.gmra.mxu0 %v101
  %v120 = vpop.f32.mrf.mxu0
  %v121 = vadd.f32 %v102, %v120
  %122 = vdwg.mxu0
  %v123 = vmul.f32 %v121, %v121
  %v125 = vsel %vm75, %v123, 0
  %127 = vmatpush.msra.mxu0 0.0
  %128 = vmatpush.msra.mxu0 0.0
  %129 = vmatpush.msra.mxu0 0.0
  %130 = vmatpush.msra.mxu0 0.0
  %131 = vmatpush.msra.mxu0 0.0
  %132 = vmatpush.msra.mxu0 0.0
  %133 = vmatpush.msra.mxu0 0.0
  %134 = vmatpush.msra.mxu0 0.0
  %135 = vmatpush.msra.mxu0 %v23
  %136 = vmatpush.msra.mxu0 %v22
  %137 = vmatpush.msra.mxu0 %v21
  %138 = vmatpush.msra.mxu0 %v20
  %139 = vmatpush.msra.mxu0 %v19
  %140 = vmatpush.msra.mxu0 %v18
  %141 = vmatpush.msra.mxu0 %v17
  %142 = vmatpush.msra.mxu0 %v16
  %143 = vmatmul.f32.gmra.mxu0 %v125
  %v144 = vpop.f32.mrf.mxu0
  %v145 = vadd.f32 1e-05, %v144
  %146 = vdwg.mxu0
  %v147 = vrsqrt.pop %v145
  %v148 = vmul.f32 %v147, %v145
  %v149 = vmul.f32 %v148, %v147
  %v150 = vmul.f32 0.5, %v149
  %v151 = vsub.f32 1.5, %v150
  %v152 = vmul.f32 %v147, %v151
  %vm153 = vweird.f32 %v145
  %vm154 = vweird.f32 %v147
  %vm155 = vmor %vm153, %vm154
  %v156 = vsel %vm155, %v147, %v152
  %v157 = vmul.f32 %v121, %v156
  %v158 = vadd.f32 %v46, %v157
  %v159 = vld [vmem:[%s2 + $0x48] sm:$0xff]
  %v160 = vld [vmem:[%s2 + $0x50] sm:$0xff]
  %v161 = vld [vmem:[%s2 + $0x58] sm:$0xff]
  %v162 = vld [vmem:[%s2 + $0x60] sm:$0xff]
  %v163 = vld [vmem:[%s2 + $0x68] sm:$0xff]
  %v164 = vld [vmem:[%s2 + $0x70] sm:$0xff]
  %v165 = vld [vmem:[%s2 + $0x78] sm:$0xff]
  %v166 = vld [vmem:[%s2 + $0x80] sm:$0xff]
  %v167 = vld [vmem:[%s2 + $0x88] sm:$0x1]
  %v168 = vld [vmem:[%s1 + $0xd0] sm:$0xff]
  %v169 = vld [vmem:[%s1 + $0xd8] sm:$0xff]
  %v170 = vld [vmem:[%s1 + $0xe0] sm:$0xff]
  %v171 = vld [vmem:[%s1 + $0xe8] sm:$0xff]
  %v172 = vld [vmem:[%s1 + $0xf0] sm:$0xff]
  %v173 = vld [vmem:[%s1 + $0xf8] sm:$0xff]
  %v174 = vld [vmem:[%s1 + $0x100] sm:$0xff]
  %v175 = vld [vmem:[%s1 + $0x108] sm:$0xff]
  %v176 = vld [vmem:[%s1 + $0x110] sm:$0xff]
  %v177 = vld [vmem:[%s1 + $0x118] sm:$0xff]
  %v178 = vld [vmem:[%s1 + $0x120] sm:$0xff]
  %v179 = vld [vmem:[%s1 + $0x128] sm:$0xff]
  %v180 = vld [vmem:[%s1 + $0x130] sm:$0xff]
  %v181 = vld [vmem:[%s1 + $0x138] sm:$0xff]
  %v182 = vld [vmem:[%s1 + $0x140] sm:$0xff]
  %v183 = vld [vmem:[%s1 + $0x148] sm:$0xff]
  %v184 = vld [vmem:[%s1 + $0x150] sm:$0x1]
  %v185 = vperm.slane %v167, 0
  %v187 = vsel %vm75, %v158, 0
  %189 = vmatpush.msra.mxu0 0.0
  %190 = vmatpush.msra.mxu0 0.0
  %191 = vmatpush.msra.mxu0 0.0
  %192 = vmatpush.msra.mxu0 0.0
  %193 = vmatpush.msra.mxu0 0.0
  %194 = vmatpush.msra.mxu0 0.0
  %195 = vmatpush.msra.mxu0 0.0
  %196 = vmatpush.msra.mxu0 0.0
  %197 = vmatpush.msra.mxu0 %v166
  %198 = vmatpush.msra.mxu0 %v165
  %199 = vmatpush.msra.mxu0 %v164
  %200 = vmatpush.msra.mxu0 %v163
  %201 = vmatpush.msra.mxu0 %v162
  %202 = vmatpush.msra.mxu0 %v161
  %203 = vmatpush.msra.mxu0 %v160
  %204 = vmatpush.msra.mxu0 %v159
  %205 = vmatmul.f32.gmra.mxu0 %v187
  %v206 = vpop.f32.mrf.mxu0
  %v207 = vadd.f32 %v185, %v206
  %208 = vdwg.mxu0
  %vm209 = vcmp.gt.f32.partialorder %v207, 0.0
  %v210 = vmul.f32 %v207, 0.01
  %v211 = vsel %vm209, %v207, %v210
  %v212 = vperm.slane %v184, 0
  %213 = vmatpush.msra.mxu0 %v183
  %214 = vmatpush.msra.mxu0 %v182
  %215 = vmatpush.msra.mxu0 %v181
  %216 = vmatpush.msra.mxu0 %v180
  %217 = vmatpush.msra.mxu0 %v179
  %218 = vmatpush.msra.mxu0 %v178
  %219 = vmatpush.msra.mxu0 %v177
  %220 = vmatpush.msra.mxu0 %v176
  %221 = vmatpush.msra.mxu0 %v175
  %222 = vmatpush.msra.mxu0 %v174
  %223 = vmatpush.msra.mxu0 %v173
  %224 = vmatpush.msra.mxu0 %v172
  %225 = vmatpush.msra.mxu0 %v171
  %226 = vmatpush.msra.mxu0 %v170
  %227 = vmatpush.msra.mxu0 %v169
  %228 = vmatpush.msra.mxu0 %v168
  %229 = vmatmul.f32.gmra.mxu0 %v211
  %v230 = vpop.f32.mrf.mxu0
  %v231 = vadd.f32 %v212, %v230
  %232 = vdwg.mxu0
  %v233 = vmul.f32 %v231, %v231
  %v235 = vsel %vm75, %v233, 0
  %237 = vmatpush.msra.mxu0 0.0
  %238 = vmatpush.msra.mxu0 0.0
  %239 = vmatpush.msra.mxu0 0.0
  %240 = vmatpush.msra.mxu0 0.0
  %241 = vmatpush.msra.mxu0 0.0
  %242 = vmatpush.msra.mxu0 0.0
  %243 = vmatpush.msra.mxu0 0.0
  %244 = vmatpush.msra.mxu0 0.0
  %245 = vmatpush.msra.mxu0 %v23
  %246 = vmatpush.msra.mxu0 %v22
  %247 = vmatpush.msra.mxu0 %v21
  %248 = vmatpush.msra.mxu0 %v20
  %249 = vmatpush.msra.mxu0 %v19
  %250 = vmatpush.msra.mxu0 %v18
  %251 = vmatpush.msra.mxu0 %v17
  %252 = vmatpush.msra.mxu0 %v16
  %253 = vmatmul.f32.gmra.mxu0 %v235
  %v254 = vpop.f32.mrf.mxu0
  %v255 = vadd.f32 1e-05, %v254
  %256 = vdwg.mxu0
  %v257 = vrsqrt.pop %v255
  %v258 = vmul.f32 %v257, %v255
  %v259 = vmul.f32 %v258, %v257
  %v260 = vmul.f32 0.5, %v259
  %v261 = vsub.f32 1.5, %v260
  %v262 = vmul.f32 %v257, %v261
  %vm263 = vweird.f32 %v255
  %vm264 = vweird.f32 %v257
  %vm265 = vmor %vm263, %vm264
  %v266 = vsel %vm265, %v257, %v262
  %v267 = vmul.f32 %v231, %v266
  %v268 = vadd.f32 %v158, %v267
  %v269 = vld [vmem:[%s2 + $0x90] sm:$0xff]
  %v270 = vld [vmem:[%s2 + $0x98] sm:$0xff]
  %v271 = vld [vmem:[%s2 + $0xa0] sm:$0xff]
  %v272 = vld [vmem:[%s2 + $0xa8] sm:$0xff]
  %v273 = vld [vmem:[%s2 + $0xb0] sm:$0xff]
  %v274 = vld [vmem:[%s2 + $0xb8] sm:$0xff]
  %v275 = vld [vmem:[%s2 + $0xc0] sm:$0xff]
  %v276 = vld [vmem:[%s2 + $0xc8] sm:$0xff]
  %v277 = vld [vmem:[%s2 + $0xd0] sm:$0x1]
  %v278 = vperm.slane %v277, 0
  %v280 = vsel %vm75, %v268, 0
  %282 = vmatpush.msra.mxu0 0.0
  %283 = vmatpush.msra.mxu0 0.0
  %284 = vmatpush.msra.mxu0 0.0
  %285 = vmatpush.msra.mxu0 0.0
  %286 = vmatpush.msra.mxu0 0.0
  %287 = vmatpush.msra.mxu0 0.0
  %288 = vmatpush.msra.mxu0 0.0
  %289 = vmatpush.msra.mxu0 0.0
  %290 = vmatpush.msra.mxu0 %v276
  %291 = vmatpush.msra.mxu0 %v275
  %292 = vmatpush.msra.mxu0 %v274
  %293 = vmatpush.msra.mxu0 %v273
  %294 = vmatpush.msra.mxu0 %v272
  %295 = vmatpush.msra.mxu0 %v271
  %296 = vmatpush.msra.mxu0 %v270
  %297 = vmatpush.msra.mxu0 %v269
  %298 = vmatmul.f32.gmra.mxu0 %v280
  %v299 = vpop.f32.mrf.mxu0
  %v300 = vadd.f32 %v278, %v299
  %301 = vdwg.mxu0
  %302 = vst [vmem:[%s3] sm:$0xff] %v300
  // Predicated region
  $region14: #{actor_critic_forward.1} parent=0 // pred_check
    _
  $region15: #{actor_critic_forward.1} parent=0 // pred_check_branch
    %304 = sbr.rel (0) target = $region17
  $region16: #{actor_critic_forward.1} parent=0 // pred_region
    _
  $region17: #{actor_critic_forward.1} parent=0 // pred_fallthru
    _
  // Predicated region
  $region18: #{actor_critic_forward.1} parent=0 // pred_check
    _
  $region19: #{actor_critic_forward.1} parent=0 // pred_check_branch
    %306 = sbr.rel (0) target = $region21
  $region20: #{actor_critic_forward.1} parent=0 // pred_region
    _
  $region21: #{actor_critic_forward.1} parent=0 // pred_fallthru
    _

</llo_original>
